<compile_context>
chip_gen: v6e
topology: v6e:2x2x1
jax: 0.10.0
libtpu: 0.0.40
codegen_flags: <defaults>
</compile_context>

<pallas_src>
import jax
import jax.numpy as jnp
from jax.experimental import pallas as pl
from jax.experimental.pallas import tpu as pltpu


def neuralnet_kernel(x_ref, w1_ref, b1_ref, w2_ref, b2_ref, o_ref):
    # First linear.  Global normalization is already folded into (w1, b1) by the
    # wrapper, so this tile of x goes straight to the MXU.
    h = jnp.dot(x_ref[...], w1_ref[...], preferred_element_type=jnp.float32) + b1_ref[...]

    # SiLU: h * sigmoid(h).  exp() lands on the EUP slot; the single divide is on a
    # (tile_n, 32) slab only (approx reciprocal deliberately skipped to keep the
    # result bit-close to the exact-sigmoid reference).
    h = h * (1.0 / (1.0 + jnp.exp(-h)))

    # Second linear into the lane-dense (128-wide, zero-padded) output slab.
    o_ref[...] = (jnp.dot(h, w2_ref[...], preferred_element_type=jnp.float32)
                  + b2_ref[...]).astype(o_ref.dtype)


def neuralnet_forward(x, w1, b1, w2, b2, *, tile_n=512):
    """x: (N, in_size); w1: (in_size, hidden); b1: (1, hidden);
    w2: (hidden, out_size); b2: (1, out_size).  Returns (N, out_size) float32."""
    N, in_size = x.shape
    hidden = w1.shape[1]
    out_size = w2.shape[1]

    xf = x.astype(jnp.float32)
    w1f = w1.astype(jnp.float32)
    b1f = b1.astype(jnp.float32)
    w2f = w2.astype(jnp.float32)
    b2f = b2.astype(jnp.float32)

    # --- Global stats: one pass over x, done once in the wrapper, folded into layer 1. ---
    mean = jnp.mean(xf)
    var = jnp.var(xf, ddof=1)            # unbiased, same as torch.Tensor.std()
    inv_std = jax.lax.rsqrt(var)         # EUP rsqrt; no full-array divide anywhere
    # silu(((x-mean)*inv_std) @ W1 + b1) == silu(x @ (inv_std*W1) + (b1 - mean*inv_std*colsum(W1)))
    w1_eff = w1f * inv_std                                               # tiny (in, 32) scale
    b1_eff = b1f - mean * inv_std * jnp.sum(w1f, axis=0, keepdims=True)  # tiny (1, 32) bias

    # --- Lane-dense output: pad the small out dim up to a multiple of 128 (zero columns). ---
    out_pad = ((out_size + 127) // 128) * 128
    w2_p = jnp.zeros((hidden, out_pad), jnp.float32).at[:, :out_size].set(w2f)
    b2_p = jnp.zeros((1, out_pad), jnp.float32).at[:, :out_size].set(b2f)

    # --- Row tiling: grid over N; "parallel" so v7x shards the grid across its 2 TCs. ---
    if N >= 8:
        tile_n = max(8, (min(tile_n, N) // 8) * 8)   # multiple of 8 sublanes
    else:
        tile_n = N                                   # block == full array is also legal
    n_pad = pl.cdiv(N, tile_n) * tile_n
    if n_pad != N:
        xf = jnp.pad(xf, ((0, n_pad - N), (0, 0)))   # zero rows; sliced off below
    grid = (n_pad // tile_n,)

    y_pad = pl.pallas_call(
        neuralnet_kernel,
        out_shape=jax.ShapeDtypeStruct((n_pad, out_pad), jnp.float32),
        grid=grid,
        in_specs=[
            pl.BlockSpec((tile_n, in_size), lambda i: (i, 0)),   # x tile (pipelined)
            pl.BlockSpec((in_size, hidden), lambda i: (0, 0)),   # folded W1 (resident)
            pl.BlockSpec((1, hidden), lambda i: (0, 0)),         # folded b1
            pl.BlockSpec((hidden, out_pad), lambda i: (0, 0)),   # padded W2
            pl.BlockSpec((1, out_pad), lambda i: (0, 0)),        # padded b2
        ],
        out_specs=pl.BlockSpec((tile_n, out_pad), lambda i: (i, 0)),
        compiler_params=pltpu.CompilerParams(
            dimension_semantics=("parallel",),
            # Explicit budget: per-block double-buffered working set is <1 MiB at
            # TILE_N=512, so 32 MiB leaves ample headroom even on v7x (64 MiB physical).
            vmem_limit_bytes=32 * 1024 * 1024,
        ),
    )(xf, w1_eff, b1_eff, w2_p, b2_p)

    return y_pad[:N, :out_size]


if __name__ == "__main__":
    # Small shapes consistent with the module: N=8, in_size=16, hidden=32, out_size=4.
    N, in_size, hidden, out_size = 8, 16, 32, 4

    key = jax.random.PRNGKey(0)
    kx, kw1, kb1, kw2, kb2 = jax.random.split(key, 5)

    x = jax.random.normal(kx, (N, in_size), dtype=jnp.float32)

    # Deterministic PyTorch-style Linear init: U(-1/sqrt(fan_in), 1/sqrt(fan_in)).
    bound1 = 1.0 / jnp.sqrt(jnp.float32(in_size))
    w1 = jax.random.uniform(kw1, (in_size, hidden), jnp.float32, -bound1, bound1)
    b1 = jax.random.uniform(kb1, (1, hidden), jnp.float32, -bound1, bound1)

    bound2 = 1.0 / jnp.sqrt(jnp.float32(hidden))
    w2 = jax.random.uniform(kw2, (hidden, out_size), jnp.float32, -bound2, bound2)
    b2 = jax.random.uniform(kb2, (1, out_size), jnp.float32, -bound2, bound2)

    y = neuralnet_forward(x, w1, b1, w2, b2)
    jax.block_until_ready(y)

    # Pure-JAX reference (matches the PyTorch forward semantics).
    mean = jnp.mean(x)
    std = jnp.std(x, ddof=1)
    xn = (x - mean) / std
    h = xn @ w1 + b1
    h = h * jax.nn.sigmoid(h)
    y_ref = h @ w2 + b2

    assert y.shape == (N, out_size)
    assert jnp.allclose(y, y_ref, atol=1e-4, rtol=1e-4), "mismatch vs reference"

    print("KERNEL_OK")
</pallas_src>

<mosaic_0001>
module attributes {stable_mosaic.version = 11 : i64} {
  func.func @neuralnet_kernel(%arg0: i32, %arg1: memref<8x16xf32, #tpu.memory_space<vmem>>, %arg2: memref<16x32xf32, #tpu.memory_space<vmem>>, %arg3: memref<1x32xf32, #tpu.memory_space<vmem>>, %arg4: memref<32x128xf32, #tpu.memory_space<vmem>>, %arg5: memref<1x128xf32, #tpu.memory_space<vmem>>, %arg6: memref<8x128xf32, #tpu.memory_space<vmem>>) attributes {dimension_semantics = [#tpu.dimension_semantics<parallel>], iteration_bounds = array<i64: 1>, scalar_prefetch = 0 : i64, scratch_operands = 0 : i64, tpu.core_type = #tpu.core_type<tc>, window_params = [{transform_indices = @transform_0, window_bounds = array<i64: 8, 16>}, {pipeline_mode = #tpu.pipeline_mode<synchronous>, transform_indices = @transform_1, window_bounds = array<i64: 16, 32>}, {pipeline_mode = #tpu.pipeline_mode<synchronous>, transform_indices = @transform_2, window_bounds = array<i64: 1, 32>}, {pipeline_mode = #tpu.pipeline_mode<synchronous>, transform_indices = @transform_3, window_bounds = array<i64: 32, 128>}, {pipeline_mode = #tpu.pipeline_mode<synchronous>, transform_indices = @transform_4, window_bounds = array<i64: 1, 128>}, {transform_indices = @transform_5, window_bounds = array<i64: 8, 128>}]} {
    %c0 = arith.constant 0 : index
    %c0_0 = arith.constant 0 : index
    %0 = vector.load %arg1[%c0, %c0_0] : memref<8x16xf32, #tpu.memory_space<vmem>>, vector<8x16xf32>
    %c0_1 = arith.constant 0 : index
    %c0_2 = arith.constant 0 : index
    %1 = vector.load %arg2[%c0_1, %c0_2] : memref<16x32xf32, #tpu.memory_space<vmem>>, vector<16x32xf32>
    %cst = arith.constant dense<0.000000e+00> : vector<8x32xf32>
    %2 = tpu.matmul %0, %1, %cst {dimension_numbers = #tpu.dot_dimension_numbers<[1], [0], [0], [1], [0, 0, 1, 1], [], []>} : vector<8x16xf32>, vector<16x32xf32>, vector<8x32xf32> -> vector<8x32xf32>
    %c0_3 = arith.constant 0 : index
    %c0_4 = arith.constant 0 : index
    %3 = vector.load %arg3[%c0_3, %c0_4] : memref<1x32xf32, #tpu.memory_space<vmem>>, vector<1x32xf32>
    %4 = vector.broadcast %3 : vector<1x32xf32> to vector<8x32xf32>
    %5 = arith.addf %2, %4 : vector<8x32xf32>
    %cst_5 = arith.constant 0.000000e+00 : f32
    %6 = vector.broadcast %cst_5 : f32 to vector<8x32xf32>
    %7 = arith.subf %6, %5 : vector<8x32xf32>
    %8 = math.exp %7 : vector<8x32xf32>
    %cst_6 = arith.constant 1.000000e+00 : f32
    %9 = vector.broadcast %cst_6 : f32 to vector<8x32xf32>
    %10 = arith.addf %9, %8 : vector<8x32xf32>
    %cst_7 = arith.constant 1.000000e+00 : f32
    %11 = vector.broadcast %cst_7 : f32 to vector<8x32xf32>
    %12 = arith.divf %11, %10 : vector<8x32xf32>
    %13 = arith.mulf %5, %12 : vector<8x32xf32>
    %c0_8 = arith.constant 0 : index
    %c0_9 = arith.constant 0 : index
    %14 = vector.load %arg4[%c0_8, %c0_9] : memref<32x128xf32, #tpu.memory_space<vmem>>, vector<32x128xf32>
    %cst_10 = arith.constant dense<0.000000e+00> : vector<8x128xf32>
    %15 = tpu.matmul %13, %14, %cst_10 {dimension_numbers = #tpu.dot_dimension_numbers<[1], [0], [0], [1], [0, 0, 1, 1], [], []>} : vector<8x32xf32>, vector<32x128xf32>, vector<8x128xf32> -> vector<8x128xf32>
    %c0_11 = arith.constant 0 : index
    %c0_12 = arith.constant 0 : index
    %16 = vector.load %arg5[%c0_11, %c0_12] : memref<1x128xf32, #tpu.memory_space<vmem>>, vector<1x128xf32>
    %17 = vector.broadcast %16 : vector<1x128xf32> to vector<8x128xf32>
    %18 = arith.addf %15, %17 : vector<8x128xf32>
    %c0_13 = arith.constant 0 : index
    %c0_14 = arith.constant 0 : index
    %19 = vector.load %arg6[%c0_13, %c0_14] : memref<8x128xf32, #tpu.memory_space<vmem>>, vector<8x128xf32>
    tpu.vector_store %arg6[%c0_13, %c0_14], %18 {strides = array<i32>} : memref<8x128xf32, #tpu.memory_space<vmem>>, vector<8x128xf32>,
    return
  }
  func.func @transform_0(%arg0: i32) -> (i32, i32) {
    %c0_i32 = arith.constant 0 : i32
    %c0_i32_0 = arith.constant 0 : i32
    return %arg0, %c0_i32 : i32, i32
  }
  func.func @transform_1(%arg0: i32) -> (i32, i32) {
    %c0_i32 = arith.constant 0 : i32
    %c0_i32_0 = arith.constant 0 : i32
    %c0_i32_1 = arith.constant 0 : i32
    return %c0_i32, %c0_i32_0 : i32, i32
  }
  func.func @transform_2(%arg0: i32) -> (i32, i32) {
    %c0_i32 = arith.constant 0 : i32
    %c0_i32_0 = arith.constant 0 : i32
    %c0_i32_1 = arith.constant 0 : i32
    return %c0_i32, %c0_i32_0 : i32, i32
  }
  func.func @transform_3(%arg0: i32) -> (i32, i32) {
    %c0_i32 = arith.constant 0 : i32
    %c0_i32_0 = arith.constant 0 : i32
    %c0_i32_1 = arith.constant 0 : i32
    return %c0_i32, %c0_i32_0 : i32, i32
  }
  func.func @transform_4(%arg0: i32) -> (i32, i32) {
    %c0_i32 = arith.constant 0 : i32
    %c0_i32_0 = arith.constant 0 : i32
    %c0_i32_1 = arith.constant 0 : i32
    return %c0_i32, %c0_i32_0 : i32, i32
  }
  func.func @transform_5(%arg0: i32) -> (i32, i32) {
    %c0_i32 = arith.constant 0 : i32
    %c0_i32_0 = arith.constant 0 : i32
    return %arg0, %c0_i32 : i32, i32
  }
}

</mosaic_0001>

<llo_original>
// kernel: tpu_custom_call.1
$region0: #{tpu_custom_call.1}
  #allocation0 [shape = 'u32[]', space=smem, size = 0x4, offset = 0x4, fixed_abs, tag = 'smem constant byte address 0x4 - core index']
  #allocation1 [shape = 'u32[144,128]{1,0:T(1,128)}', space=vmem, size = 0x12000, scoped, tag = 'internal scratch']
  %s0 = inlined_call_operand.hbm [shape: f32[8,16], index: 0, kind: input, shape index: {}]
  %s1 = inlined_call_operand.hbm [shape: f32[16,32], index: 1, kind: input, shape index: {}]
  %s2 = inlined_call_operand.vmem [shape: f32[1,32], index: 2, kind: input, shape index: {}]
  %s3 = inlined_call_operand.hbm [shape: f32[32,128], index: 3, kind: input, shape index: {}]
  %s4 = inlined_call_operand.vmem [shape: f32[1,128], index: 4, kind: input, shape index: {}]
  %s5 = inlined_call_operand.hbm [shape: f32[8,128], index: 5, kind: output, shape index: {}]
  %s6 = sld [smem:[#allocation0]]
  $region42: #{tpu_custom_call.1} parent=0
    _
  %s8 = ssub.s32 1, %s6
  %s9 = scalar_select 0, %s8, %s6
  $region1: #{tpu_custom_call.1} parent=0
    #allocation2 [shape = 'u8[4096]{0}', space=vmem, size = 0x1000, scoped, tag = 'input window, operand 0, single buffered']
    #allocation3 [shape = 's32[1]{0}', space=sflag, size = 0x4, scoped, tag = 'scoped memory for tpu_custom_call.1']
    #allocation4 [shape = 's32[1]{0}', space=sflag, size = 0x4, scoped, tag = 'scoped memory for tpu_custom_call.1']
    #allocation5 [shape = 'u8[8192]{0}', space=vmem, size = 0x2000, scoped, tag = 'input window, operand 1, single buffered']
    #allocation6 [shape = 's32[1]{0}', space=sflag, size = 0x4, scoped, tag = 'scoped memory for tpu_custom_call.1']
    #allocation7 [shape = 'u8[16384]{0}', space=vmem, size = 0x4000, scoped, tag = 'input window, operand 3, single buffered']
    #allocation8 [shape = 'u8[4096]{0}', space=vmem, size = 0x1000, scoped, tag = 'output window, operand 0, single buffered']
    %10 = vsyncpa [#allocation3], 0
    %11 = vsyncpa [#allocation6], 0
    %12 = vsyncpa [#allocation4], 0
    // Predicated region
    $region2: #{tpu_custom_call.1} parent=1 // pred_check
      _
    $region3: #{tpu_custom_call.1} parent=1 // pred_check_branch
      %14 = sbr.rel (0) target = $region5
    $region4: #{tpu_custom_call.1} parent=1 // pred_region
      %s16 = ssub.s32 128, 128
      %17 = vsyncadd [#allocation3], %s16
      %s19 = sshll.u32 [#allocation2], 4
      %s20 = int_to_ptr.vmem [resolvable:$true] %s19
      %22 = dma.hbm_to_vmem [thread:$0]  %s0, 128, %s20, [#allocation3]
    $region5: #{tpu_custom_call.1} parent=1 // pred_fallthru
      _
    // Predicated region
    $region6: #{tpu_custom_call.1} parent=1 // pred_check
      _
    $region7: #{tpu_custom_call.1} parent=1 // pred_check_branch
      %24 = sbr.rel (0) target = $region9
    $region8: #{tpu_custom_call.1} parent=1 // pred_region
      %s26 = ssub.s32 256, 256
      %27 = vsyncadd [#allocation6], %s26
      %s28 = sshll.u32 [#allocation5], 4
      %s29 = int_to_ptr.vmem [resolvable:$true] %s28
      %34 = dma.hbm_to_vmem [thread:$0]  %s1, 256, %s29, [#allocation6], 128, 128, 8
    $region9: #{tpu_custom_call.1} parent=1 // pred_fallthru
      _
    // Predicated region
    $region10: #{tpu_custom_call.1} parent=1 // pred_check
      _
    $region11: #{tpu_custom_call.1} parent=1 // pred_check_branch
      %36 = sbr.rel (0) target = $region13
    $region12: #{tpu_custom_call.1} parent=1 // pred_region
      _
    $region13: #{tpu_custom_call.1} parent=1 // pred_fallthru
      _
    // Predicated region
    $region14: #{tpu_custom_call.1} parent=1 // pred_check
      _
    $region15: #{tpu_custom_call.1} parent=1 // pred_check_branch
      %38 = sbr.rel (0) target = $region17
    $region16: #{tpu_custom_call.1} parent=1 // pred_region
      %s40 = ssub.s32 512, 512
      %41 = vsyncadd [#allocation6], %s40
      %s42 = sshll.u32 [#allocation7], 4
      %s43 = int_to_ptr.vmem [resolvable:$true] %s42
      %48 = dma.hbm_to_vmem [thread:$0]  %s3, 512, %s43, [#allocation6], 128, 128, 8
    $region17: #{tpu_custom_call.1} parent=1 // pred_fallthru
      _
    // Predicated region
    $region18: #{tpu_custom_call.1} parent=1 // pred_check
      _
    $region19: #{tpu_custom_call.1} parent=1 // pred_check_branch
      %50 = sbr.rel (0) target = $region21
    $region20: #{tpu_custom_call.1} parent=1 // pred_region
      _
    $region21: #{tpu_custom_call.1} parent=1 // pred_fallthru
      _
    // Predicated region
    $region22: #{tpu_custom_call.1} parent=1 // pred_check
      _
    $region23: #{tpu_custom_call.1} parent=1 // pred_check_branch
      %52 = sbr.rel (0) target = $region25
    $region24: #{tpu_custom_call.1} parent=1 // pred_region
      %53 = dma.done [#allocation3], 128
    $region25: #{tpu_custom_call.1} parent=1 // pred_fallthru
      _
    // Predicated region
    $region26: #{tpu_custom_call.1} parent=1 // pred_check
      _
    $region27: #{tpu_custom_call.1} parent=1 // pred_check_branch
      %55 = sbr.rel (0) target = $region29
    $region28: #{tpu_custom_call.1} parent=1 // pred_region
      %56 = dma.done [#allocation6], 256
    $region29: #{tpu_custom_call.1} parent=1 // pred_fallthru
      _
    // Predicated region
    $region30: #{tpu_custom_call.1} parent=1 // pred_check
      _
    $region31: #{tpu_custom_call.1} parent=1 // pred_check_branch
      %58 = sbr.rel (0) target = $region33
    $region32: #{tpu_custom_call.1} parent=1 // pred_region
      %59 = dma.done [#allocation6], 512
    $region33: #{tpu_custom_call.1} parent=1 // pred_fallthru
      _
    %v60 = vld [vmem:[#allocation2] sm:$0xff]
    %v61 = vld [vmem:[#allocation5] sm:$0xff]
    %v62 = vld [vmem:[#allocation5 + $0x8] sm:$0xff]
    %v63 = vld [vmem:[%s2] sm:$0x1]
    %v65 = vlaneseq
    %v66 = vshrl.u32 %v65, 7
    %v67 = vsub.s32 0, %v66
    %v68 = vrot.slane %v63, %v67
    %vm70 = vcmask 130048
    %v72 = vsel %vm70, %v60, 0
    %74 = vmatprep.subr.mxu0 0.0
    %75 = vmatpush1.msra.mxu0 0.0
    %76 = vmatprep.subr.mxu0 0.0
    %77 = vmatpush1.msra.mxu0 0.0
    %78 = vmatprep.subr.mxu0 0.0
    %79 = vmatpush1.msra.mxu0 0.0
    %80 = vmatprep.subr.mxu0 0.0
    %81 = vmatpush1.msra.mxu0 0.0
    %82 = vmatprep.subr.mxu0 0.0
    %83 = vmatpush1.msra.mxu0 0.0
    %84 = vmatprep.subr.mxu0 0.0
    %85 = vmatpush1.msra.mxu0 0.0
    %86 = vmatprep.subr.mxu0 0.0
    %87 = vmatpush1.msra.mxu0 0.0
    %88 = vmatprep.subr.mxu0 0.0
    %89 = vmatpush1.msra.mxu0 0.0
    %90 = vmatprep.subr.mxu0 0.0
    %91 = vmatpush1.msra.mxu0 0.0
    %92 = vmatprep.subr.mxu0 0.0
    %93 = vmatpush1.msra.mxu0 0.0
    %94 = vmatprep.subr.mxu0 0.0
    %95 = vmatpush1.msra.mxu0 0.0
    %96 = vmatprep.subr.mxu0 0.0
    %97 = vmatpush1.msra.mxu0 0.0
    %98 = vmatprep.subr.mxu0 0.0
    %99 = vmatpush1.msra.mxu0 0.0
    %100 = vmatprep.subr.mxu0 0.0
    %101 = vmatpush1.msra.mxu0 0.0
    %102 = vmatprep.subr.mxu0 0.0
    %103 = vmatpush1.msra.mxu0 %v62
    %104 = vmatprep.subr.mxu0 0.0
    %105 = vmatpush1.msra.mxu0 %v61
    %106 = vmatprep.subr.mxu0 0.0
    %107 = vmatpush2.msra.mxu0 0.0
    %108 = vmatprep.subr.mxu0 0.0
    %109 = vmatpush2.msra.mxu0 0.0
    %110 = vmatprep.subr.mxu0 0.0
    %111 = vmatpush2.msra.mxu0 0.0
    %112 = vmatprep.subr.mxu0 0.0
    %113 = vmatpush2.msra.mxu0 0.0
    %114 = vmatprep.subr.mxu0 0.0
    %115 = vmatpush2.msra.mxu0 0.0
    %116 = vmatprep.subr.mxu0 0.0
    %117 = vmatpush2.msra.mxu0 0.0
    %118 = vmatprep.subr.mxu0 0.0
    %119 = vmatpush2.msra.mxu0 0.0
    %120 = vmatprep.subr.mxu0 0.0
    %121 = vmatpush2.msra.mxu0 0.0
    %122 = vmatprep.subr.mxu0 0.0
    %123 = vmatpush2.msra.mxu0 0.0
    %124 = vmatprep.subr.mxu0 0.0
    %125 = vmatpush2.msra.mxu0 0.0
    %126 = vmatprep.subr.mxu0 0.0
    %127 = vmatpush2.msra.mxu0 0.0
    %128 = vmatprep.subr.mxu0 0.0
    %129 = vmatpush2.msra.mxu0 0.0
    %130 = vmatprep.subr.mxu0 0.0
    %131 = vmatpush2.msra.mxu0 0.0
    %132 = vmatprep.subr.mxu0 0.0
    %133 = vmatpush2.msra.mxu0 0.0
    %134 = vmatprep.subr.mxu0 0.0
    %135 = vmatpush2.msra.mxu0 0.0
    %136 = vmatprep.subr.mxu0 0.0
    %137 = vmatpush2.msra.mxu0 0.0
    %138 = vmatprep.mubr.f32.mxu0 0.0
    %139 = vmatmul.mubr.f32.gmra.mxu0 %v72
    %v140 = vpop.f32.mrf.mxu0
    %v141 = vadd.f32 %v68, %v140
    %v142 = vpop.f32.mrf.mxu0
    %143 = vdwg.mxu0
    %v144 = vsub.f32 0.0, %v141
    %v145 = vmul.f32 %v144, 1.442695
    %v146 = vpow.pop %v145
    %v147 = vadd.f32 %v146, 1.0
    %v148 = vrcp.pop %v147
    %v149 = vmul.f32 1.0, %v148
    %v150 = vmul.f32 %v141, %v149
    %v151 = vld [vmem:[#allocation7] sm:$0xff]
    %v152 = vld [vmem:[#allocation7 + $0x8] sm:$0xff]
    %v153 = vld [vmem:[#allocation7 + $0x10] sm:$0xff]
    %v154 = vld [vmem:[#allocation7 + $0x18] sm:$0xff]
    %v155 = vld [vmem:[%s4] sm:$0x1]
    %v157 = vlaneseq
    %v158 = vshrl.u32 %v157, 7
    %v159 = vsub.s32 0, %v158
    %v160 = vrot.slane %v155, %v159
    %vm162 = vcmask 261120
    %v164 = vsel %vm162, %v150, 0
    %166 = vmatprep.subr.mxu0 0.0
    %167 = vmatpush1.msra.mxu0 0.0
    %168 = vmatprep.subr.mxu0 0.0
    %169 = vmatpush1.msra.mxu0 0.0
    %170 = vmatprep.subr.mxu0 0.0
    %171 = vmatpush1.msra.mxu0 0.0
    %172 = vmatprep.subr.mxu0 0.0
    %173 = vmatpush1.msra.mxu0 0.0
    %174 = vmatprep.subr.mxu0 0.0
    %175 = vmatpush1.msra.mxu0 0.0
    %176 = vmatprep.subr.mxu0 0.0
    %177 = vmatpush1.msra.mxu0 0.0
    %178 = vmatprep.subr.mxu0 0.0
    %179 = vmatpush1.msra.mxu0 0.0
    %180 = vmatprep.subr.mxu0 0.0
    %181 = vmatpush1.msra.mxu0 0.0
    %182 = vmatprep.subr.mxu0 0.0
    %183 = vmatpush1.msra.mxu0 0.0
    %184 = vmatprep.subr.mxu0 0.0
    %185 = vmatpush1.msra.mxu0 0.0
    %186 = vmatprep.subr.mxu0 0.0
    %187 = vmatpush1.msra.mxu0 0.0
    %188 = vmatprep.subr.mxu0 0.0
    %189 = vmatpush1.msra.mxu0 0.0
    %190 = vmatprep.subr.mxu0 0.0
    %191 = vmatpush1.msra.mxu0 %v154
    %192 = vmatprep.subr.mxu0 0.0
    %193 = vmatpush1.msra.mxu0 %v153
    %194 = vmatprep.subr.mxu0 0.0
    %195 = vmatpush1.msra.mxu0 %v152
    %196 = vmatprep.subr.mxu0 0.0
    %197 = vmatpush1.msra.mxu0 %v151
    %198 = vmatprep.subr.mxu0 0.0
    %199 = vmatpush2.msra.mxu0 0.0
    %200 = vmatprep.subr.mxu0 0.0
    %201 = vmatpush2.msra.mxu0 0.0
    %202 = vmatprep.subr.mxu0 0.0
    %203 = vmatpush2.msra.mxu0 0.0
    %204 = vmatprep.subr.mxu0 0.0
    %205 = vmatpush2.msra.mxu0 0.0
    %206 = vmatprep.subr.mxu0 0.0
    %207 = vmatpush2.msra.mxu0 0.0
    %208 = vmatprep.subr.mxu0 0.0
    %209 = vmatpush2.msra.mxu0 0.0
    %210 = vmatprep.subr.mxu0 0.0
    %211 = vmatpush2.msra.mxu0 0.0
    %212 = vmatprep.subr.mxu0 0.0
    %213 = vmatpush2.msra.mxu0 0.0
    %214 = vmatprep.subr.mxu0 0.0
    %215 = vmatpush2.msra.mxu0 0.0
    %216 = vmatprep.subr.mxu0 0.0
    %217 = vmatpush2.msra.mxu0 0.0
    %218 = vmatprep.subr.mxu0 0.0
    %219 = vmatpush2.msra.mxu0 0.0
    %220 = vmatprep.subr.mxu0 0.0
    %221 = vmatpush2.msra.mxu0 0.0
    %222 = vmatprep.subr.mxu0 0.0
    %223 = vmatpush2.msra.mxu0 0.0
    %224 = vmatprep.subr.mxu0 0.0
    %225 = vmatpush2.msra.mxu0 0.0
    %226 = vmatprep.subr.mxu0 0.0
    %227 = vmatpush2.msra.mxu0 0.0
    %228 = vmatprep.subr.mxu0 0.0
    %229 = vmatpush2.msra.mxu0 0.0
    %230 = vmatprep.mubr.f32.mxu0 0.0
    %231 = vmatmul.mubr.f32.gmra.mxu0 %v164
    %v232 = vpop.f32.mrf.mxu0
    %v233 = vadd.f32 %v160, %v232
    %v234 = vpop.f32.mrf.mxu0
    %235 = vdwg.mxu0
    %236 = vst [vmem:[#allocation8] sm:$0xff] %v233
    // Predicated region
    $region34: #{tpu_custom_call.1} parent=1 // pred_check
      _
    $region35: #{tpu_custom_call.1} parent=1 // pred_check_branch
      %238 = sbr.rel (0) target = $region37
    $region36: #{tpu_custom_call.1} parent=1 // pred_region
      %s240 = ssub.s32 128, 128
      %241 = vsyncadd [#allocation4], %s240
      %s243 = sshll.u32 [#allocation8], 4
      %s244 = int_to_ptr.vmem [resolvable:$true] %s243
      %246 = dma.vmem_to_hbm [thread:$0]  %s244, 128, %s5, [#allocation4]
    $region37: #{tpu_custom_call.1} parent=1 // pred_fallthru
      _
    // Predicated region
    $region38: #{tpu_custom_call.1} parent=1 // pred_check
      _
    $region39: #{tpu_custom_call.1} parent=1 // pred_check_branch
      %248 = sbr.rel (0) target = $region41
    $region40: #{tpu_custom_call.1} parent=1 // pred_region
      %249 = dma.done [#allocation4], 128
    $region41: #{tpu_custom_call.1} parent=1 // pred_fallthru
      _
    %250 = vsyncpa [#allocation3], 1
    %251 = vsyncpa [#allocation6], 1
    %252 = vsyncpa [#allocation4], 1

</llo_original>
